<compile_context>
chip_gen: v5e
topology: v5e:2x2
jax: 0.10.0
libtpu: 0.0.40
codegen_flags: <defaults>
</compile_context>

<pallas_src>
import jax
import jax.numpy as jnp
from jax import lax
from jax.experimental import pallas as pl
from jax.experimental.pallas import tpu as pltpu


def _make_vq_kernel(D, K, t_hw, hw_valid, hw_pad):
    """Build the VQ kernel body; all arguments are trace-time constants."""
    needs_mask = hw_pad != hw_valid  # only true when the hw axis was padded

    def kernel(x_ref, em2_ref, e2_ref, et_ref, q_ref, idx_ref, sse_ref):
        x = x_ref[...]        # (D, T)  pixels on lanes, channels on sublanes
        em2 = em2_ref[...]    # (K, D)  = -2 * embedding      (folded constant)
        e2 = e2_ref[...]      # (K, 1)  = ||e_k||^2           (precomputed)
        et = et_ref[...]      # (D, K)  = embedding^T         (precomputed)

        # scores[k, n] = ||e_k||^2 - 2 <e_k, x_n>
        # (||x_n||^2 is constant per column -> argmin unchanged, dropped.)
        # MXU handles the tiny contraction; VALU slot stays free for the
        # compare/select work below.
        scores = jnp.dot(em2, x, preferred_element_type=jnp.float32) + e2  # (K, T)

        # argmin over codes (sublane axis), first occurrence on ties.
        row = lax.broadcasted_iota(jnp.int32, scores.shape, 0)            # (K, T)
        smin = jnp.min(scores, axis=0, keepdims=True)                     # (1, T)
        idx = jnp.min(jnp.where(scores == smin, row, K),
                      axis=0, keepdims=True)                              # (1, T) i32
        onehot = (row == idx).astype(jnp.float32)                         # (K, T)

        # quantized[:, n] = embedding[idx[n], :]  (lane-dense (D, T) output)
        quant = jnp.dot(et, onehot, preferred_element_type=jnp.float32)   # (D, T)

        q_ref[...] = quant
        idx_ref[...] = idx

        # Per-tile partial SSE (reduced in the wrapper) -> no carried
        # accumulator, so both grid axes are "parallel".
        diff = quant - x
        if not needs_mask:
            sse_ref[...] = jnp.sum(diff * diff).reshape(1, 1)
        else:
            j = pl.program_id(1)
            last = pl.num_programs(1) - 1

            @pl.when(j != last)
            def _():
                sse_ref[...] = jnp.sum(diff * diff).reshape(1, 1)

            @pl.when(j == last)  # only the last hw-tile has padded columns
            def _():
                lane = lax.broadcasted_iota(jnp.int32, (1, t_hw), 1)
                valid = ((j * t_hw + lane) < hw_valid).astype(jnp.float32)
                sse_ref[...] = jnp.sum(diff * diff * valid).reshape(1, 1)

    return kernel


def vector_quantizer_forward(x_nchw, embedding, commitment_cost,
                             max_tile_cols=16384):
    """Forward pass of VectorQuantizer.

    Returns (loss, quantized_nchw, perplexity, encodings), mirroring the
    PyTorch module's forward values.
    """
    assert max_tile_cols % 128 == 0
    B, C, H, W = x_nchw.shape
    D = C
    K = embedding.shape[0]
    HW = H * W
    N = B * HW

    # Free view of NCHW: channels on sublanes, pixels on lanes.  No transpose.
    x_bdn = x_nchw.reshape(B, D, HW).astype(jnp.float32)

    # Column-tile selection over the H*W axis.
    if HW <= max_tile_cols:
        t_hw = HW            # full-dim tile: no (8,128) constraint, no padding
        num_hw_tiles = 1
        # v7x megacore: keep >=2 grid tiles when it costs nothing.
        if B == 1 and HW >= 256 and HW % 256 == 0:
            t_hw = HW // 2
            num_hw_tiles = 2
        hw_pad = HW
    else:
        t_hw = max_tile_cols                       # multiple of 128
        num_hw_tiles = pl.cdiv(HW, t_hw)
        hw_pad = num_hw_tiles * t_hw
        if hw_pad != HW:
            x_bdn = jnp.pad(x_bdn, ((0, 0), (0, 0), (0, hw_pad - HW)))

    # Grid-invariant codebook quantities hoisted out of the kernel
    # (tiny K*D arrays -> this is not the "pre-scale in wrapper" anti-pattern).
    e = embedding.astype(jnp.float32)              # (K, D)
    em2 = -2.0 * e                                 # (K, D)
    e2 = jnp.sum(e * e, axis=1, keepdims=True)     # (K, 1)
    et = jnp.transpose(e)                          # (D, K)

    kernel = _make_vq_kernel(D, K, t_hw, HW, hw_pad)

    out_shapes = (
        jax.ShapeDtypeStruct((B, D, hw_pad), jnp.float32),           # quantized
        jax.ShapeDtypeStruct((B, 1, hw_pad), jnp.int32),             # code indices
        jax.ShapeDtypeStruct((B, num_hw_tiles, 1, 1), jnp.float32),  # per-tile SSE
    )

    quant_bdn, idx_b1n, sse_part = pl.pallas_call(
        kernel,
        out_shape=out_shapes,
        grid_spec=pltpu.PrefetchScalarGridSpec(
            num_scalar_prefetch=0,
            grid=(B, num_hw_tiles),
            in_specs=[
                # x: batch dim squeezed -> kernel sees (D, t_hw)
                pl.BlockSpec((None, D, t_hw), lambda b, j: (b, 0, j)),
                pl.BlockSpec((K, D), lambda b, j: (0, 0)),   # -2*E (grid-invariant)
                pl.BlockSpec((K, 1), lambda b, j: (0, 0)),   # ||e||^2
                pl.BlockSpec((D, K), lambda b, j: (0, 0)),   # E^T
            ],
            out_specs=[
                pl.BlockSpec((None, D, t_hw), lambda b, j: (b, 0, j)),
                pl.BlockSpec((None, 1, t_hw), lambda b, j: (b, 0, j)),
                pl.BlockSpec((None, None, 1, 1), lambda b, j: (b, j, 0, 0)),
            ],
        ),
        compiler_params=pltpu.CompilerParams(
            # No carried state across the grid -> shard across TensorCores
            # (2x headroom on v7x; harmless on v5e/v6e).
            dimension_semantics=("parallel", "parallel")),
    )(x_bdn, em2, e2, et)

    # ---- tiny plain-JAX epilogue: reductions + free-view layout glue ----
    sse = jnp.sum(sse_part)

    # q_latent_loss and e_latent_loss have identical forward values.
    # TODO(synk): detach()/straight-through estimator only change gradients,
    # not forward values, so they are not represented in this forward kernel.
    mse = sse / (N * D)
    loss = (1.0 + commitment_cost) * mse

    # (B, D, H*W) -> (B, D, H, W) is a free view (no transpose).
    quant_nchw = quant_bdn[:, :, :HW].reshape(B, D, H, W)

    # One-hot built here (it is a module output anyway); per-code counts are
    # derived from it instead of being streamed from the kernel.
    idx = idx_b1n[:, 0, :HW].reshape(-1)           # row order b*H*W + h*W + w
    encodings = jax.nn.one_hot(idx, K, dtype=jnp.float32)

    avg_probs = jnp.sum(encodings, axis=0) / N
    perplexity = jnp.exp(-jnp.sum(avg_probs * jnp.log(avg_probs + 1e-10)))

    return loss, quant_nchw, perplexity, encodings


def _reference_forward(x_nchw, embedding, commitment_cost):
    """Pure-JAX reference mirroring the PyTorch forward (for validation)."""
    B, C, H, W = x_nchw.shape
    D, K = C, embedding.shape[0]
    inputs = jnp.transpose(x_nchw, (0, 2, 3, 1))
    flat = inputs.reshape(-1, D)
    d = (jnp.sum(flat ** 2, axis=1, keepdims=True)
         + jnp.sum(embedding ** 2, axis=1)
         - 2.0 * flat @ embedding.T)
    idx = jnp.argmin(d, axis=1)
    enc = jax.nn.one_hot(idx, K, dtype=jnp.float32)
    quant = (enc @ embedding).reshape(inputs.shape)
    mse = jnp.mean((quant - inputs) ** 2)
    loss = (1.0 + commitment_cost) * mse
    avg_probs = jnp.mean(enc, axis=0)
    perplexity = jnp.exp(-jnp.sum(avg_probs * jnp.log(avg_probs + 1e-10)))
    return loss, jnp.transpose(quant, (0, 3, 1, 2)), perplexity, enc


if __name__ == "__main__":
    # Module hyperparameters
    num_embeddings = 8
    embedding_dim = 4
    commitment_cost = 0.25

    # Deterministic parameter init: nn.Embedding weight ~ U(-1/K, 1/K)
    key = jax.random.PRNGKey(0)
    k_emb, k_x = jax.random.split(key)
    embedding = jax.random.uniform(
        k_emb, (num_embeddings, embedding_dim), dtype=jnp.float32,
        minval=-1.0 / num_embeddings, maxval=1.0 / num_embeddings)

    # Input in NCHW like the PyTorch module expects: (B, C=embedding_dim, H, W)
    x = jax.random.normal(k_x, (2, embedding_dim, 16, 16), dtype=jnp.float32)

    loss, quantized, perplexity, encodings = vector_quantizer_forward(
        x, embedding, commitment_cost)
    jax.block_until_ready((loss, quantized, perplexity, encodings))

    # Validate against pure-JAX reference
    r_loss, r_quant, r_perp, r_enc = _reference_forward(x, embedding, commitment_cost)
    assert jnp.allclose(loss, r_loss, atol=1e-5), (loss, r_loss)
    assert jnp.allclose(quantized, r_quant, atol=1e-5)
    assert jnp.allclose(perplexity, r_perp, atol=1e-4), (perplexity, r_perp)
    assert jnp.allclose(encodings, r_enc)

    print("KERNEL_OK")
</pallas_src>

<mosaic_0001>
module attributes {stable_mosaic.version = 11 : i64} {
  func.func @kernel(%arg0: i32, %arg1: i32, %arg2: memref<1x4x256xf32, #tpu.memory_space<vmem>>, %arg3: memref<8x4xf32, #tpu.memory_space<vmem>>, %arg4: memref<8x1xf32, #tpu.memory_space<vmem>>, %arg5: memref<4x8xf32, #tpu.memory_space<vmem>>, %arg6: memref<1x4x256xf32, #tpu.memory_space<vmem>>, %arg7: memref<1x1x256xi32, #tpu.memory_space<vmem>>, %arg8: memref<1x1x1x1xf32, #tpu.memory_space<vmem>>) attributes {dimension_semantics = [#tpu.dimension_semantics<parallel>, #tpu.dimension_semantics<parallel>], iteration_bounds = array<i64: 2, 1>, scalar_prefetch = 0 : i64, scratch_operands = 0 : i64, tpu.core_type = #tpu.core_type<tc>, window_params = [{transform_indices = @transform_0, window_bounds = array<i64: 1, 4, 256>}, {pipeline_mode = #tpu.pipeline_mode<synchronous>, transform_indices = @transform_1, window_bounds = array<i64: 8, 4>}, {pipeline_mode = #tpu.pipeline_mode<synchronous>, transform_indices = @transform_2, window_bounds = array<i64: 8, 1>}, {pipeline_mode = #tpu.pipeline_mode<synchronous>, transform_indices = @transform_3, window_bounds = array<i64: 4, 8>}, {transform_indices = @transform_4, window_bounds = array<i64: 1, 4, 256>}, {transform_indices = @transform_5, window_bounds = array<i64: 1, 1, 256>}, {transform_indices = @transform_6, window_bounds = array<i64: 1, 1, 1, 1>}]} {
    %c0 = arith.constant 0 : index
    %c0_0 = arith.constant 0 : index
    %c0_1 = arith.constant 0 : index
    %0 = vector.load %arg2[%c0, %c0_0, %c0_1] : memref<1x4x256xf32, #tpu.memory_space<vmem>>, vector<1x4x256xf32>
    %1 = vector.shape_cast %0 : vector<1x4x256xf32> to vector<4x256xf32>
    %c0_2 = arith.constant 0 : index
    %c0_3 = arith.constant 0 : index
    %2 = vector.load %arg3[%c0_2, %c0_3] : memref<8x4xf32, #tpu.memory_space<vmem>>, vector<8x4xf32>
    %c0_4 = arith.constant 0 : index
    %c0_5 = arith.constant 0 : index
    %3 = vector.load %arg4[%c0_4, %c0_5] : memref<8x1xf32, #tpu.memory_space<vmem>>, vector<8x1xf32>
    %c0_6 = arith.constant 0 : index
    %c0_7 = arith.constant 0 : index
    %4 = vector.load %arg5[%c0_6, %c0_7] : memref<4x8xf32, #tpu.memory_space<vmem>>, vector<4x8xf32>
    %cst = arith.constant dense<0.000000e+00> : vector<8x256xf32>
    %5 = tpu.matmul %2, %1, %cst {dimension_numbers = #tpu.dot_dimension_numbers<[1], [0], [0], [1], [0, 0, 1, 1], [], []>} : vector<8x4xf32>, vector<4x256xf32>, vector<8x256xf32> -> vector<8x256xf32>
    %6 = vector.broadcast %3 : vector<8x1xf32> to vector<8x256xf32>
    %7 = arith.addf %5, %6 : vector<8x256xf32>
    %8 = tpu.iota {dimensions = array<i32: 0>} : vector<8x256xi32>
    %cst_8 = arith.constant dense<0x7F800000> : vector<256xf32>
    %9 = vector.multi_reduction <minimumf>, %7, %cst_8 [0] : vector<8x256xf32> to vector<256xf32>
    %10 = vector.shape_cast %9 : vector<256xf32> to vector<1x256xf32>
    %11 = vector.broadcast %10 : vector<1x256xf32> to vector<8x256xf32>
    %12 = arith.cmpf oeq, %7, %11 : vector<8x256xf32>
    %c8_i32 = arith.constant 8 : i32
    %13 = vector.broadcast %c8_i32 : i32 to vector<8x256xi32>
    %14 = arith.select %12, %8, %13 : vector<8x256xi1>, vector<8x256xi32>
    %cst_9 = arith.constant dense<2147483647> : vector<256xi32>
    %15 = vector.multi_reduction <minsi>, %14, %cst_9 [0] : vector<8x256xi32> to vector<256xi32>
    %16 = vector.shape_cast %15 : vector<256xi32> to vector<1x256xi32>
    %17 = vector.broadcast %16 : vector<1x256xi32> to vector<8x256xi32>
    %18 = arith.cmpi eq, %8, %17 : vector<8x256xi32>
    %19 = arith.extui %18 : vector<8x256xi1> to vector<8x256xi32>
    %20 = arith.sitofp %19 : vector<8x256xi32> to vector<8x256xf32>
    %cst_10 = arith.constant dense<0.000000e+00> : vector<4x256xf32>
    %21 = tpu.matmul %4, %20, %cst_10 {dimension_numbers = #tpu.dot_dimension_numbers<[1], [0], [0], [1], [0, 0, 1, 1], [], []>} : vector<4x8xf32>, vector<8x256xf32>, vector<4x256xf32> -> vector<4x256xf32>
    %c0_11 = arith.constant 0 : index
    %c0_12 = arith.constant 0 : index
    %c0_13 = arith.constant 0 : index
    %22 = vector.load %arg6[%c0_11, %c0_12, %c0_13] : memref<1x4x256xf32, #tpu.memory_space<vmem>>, vector<1x4x256xf32>
    %23 = vector.shape_cast %22 : vector<1x4x256xf32> to vector<4x256xf32>
    %24 = vector.shape_cast %21 : vector<4x256xf32> to vector<1x4x256xf32>
    tpu.vector_store %arg6[%c0_11, %c0_12, %c0_13], %24 {strides = array<i32>} : memref<1x4x256xf32, #tpu.memory_space<vmem>>, vector<1x4x256xf32>,
    %c0_14 = arith.constant 0 : index
    %c0_15 = arith.constant 0 : index
    %c0_16 = arith.constant 0 : index
    %25 = vector.load %arg7[%c0_14, %c0_15, %c0_16] : memref<1x1x256xi32, #tpu.memory_space<vmem>>, vector<1x1x256xi32>
    %26 = vector.shape_cast %25 : vector<1x1x256xi32> to vector<1x256xi32>
    %27 = vector.shape_cast %16 : vector<1x256xi32> to vector<1x1x256xi32>
    tpu.vector_store %arg7[%c0_14, %c0_15, %c0_16], %27 {strides = array<i32>} : memref<1x1x256xi32, #tpu.memory_space<vmem>>, vector<1x1x256xi32>,
    %28 = arith.subf %21, %1 : vector<4x256xf32>
    %29 = arith.mulf %28, %28 : vector<4x256xf32>
    %30 = vector.shape_cast %29 : vector<4x256xf32> to vector<1x4x256xf32>
    %cst_17 = arith.constant dense<0.000000e+00> : vector<1xf32>
    %31 = vector.multi_reduction <add>, %30, %cst_17 [1, 2] : vector<1x4x256xf32> to vector<1xf32>
    %32 = vector.shape_cast %31 : vector<1xf32> to vector<1x1x1xf32>
    %33 = vector.extract %32[0, 0, 0] : f32 from vector<1x1x1xf32>
    %34 = vector.broadcast %33 : f32 to vector<1x1xf32>
    %c0_18 = arith.constant 0 : index
    %c0_19 = arith.constant 0 : index
    %c0_20 = arith.constant 0 : index
    %c0_21 = arith.constant 0 : index
    %35 = vector.load %arg8[%c0_18, %c0_19, %c0_20, %c0_21] : memref<1x1x1x1xf32, #tpu.memory_space<vmem>>, vector<1x1x1x1xf32>
    %36 = vector.shape_cast %35 : vector<1x1x1x1xf32> to vector<1x1xf32>
    %37 = vector.shape_cast %34 : vector<1x1xf32> to vector<1x1x1x1xf32>
    tpu.vector_store %arg8[%c0_18, %c0_19, %c0_20, %c0_21], %37 {strides = array<i32>} : memref<1x1x1x1xf32, #tpu.memory_space<vmem>>, vector<1x1x1x1xf32>,
    return
  }
  func.func @transform_0(%arg0: i32, %arg1: i32) -> (i32, i32, i32) {
    %c0_i32 = arith.constant 0 : i32
    %c0_i32_0 = arith.constant 0 : i32
    return %arg0, %c0_i32, %arg1 : i32, i32, i32
  }
  func.func @transform_1(%arg0: i32, %arg1: i32) -> (i32, i32) {
    %c0_i32 = arith.constant 0 : i32
    %c0_i32_0 = arith.constant 0 : i32
    %c0_i32_1 = arith.constant 0 : i32
    return %c0_i32, %c0_i32_0 : i32, i32
  }
  func.func @transform_2(%arg0: i32, %arg1: i32) -> (i32, i32) {
    %c0_i32 = arith.constant 0 : i32
    %c0_i32_0 = arith.constant 0 : i32
    %c0_i32_1 = arith.constant 0 : i32
    return %c0_i32, %c0_i32_0 : i32, i32
  }
  func.func @transform_3(%arg0: i32, %arg1: i32) -> (i32, i32) {
    %c0_i32 = arith.constant 0 : i32
    %c0_i32_0 = arith.constant 0 : i32
    %c0_i32_1 = arith.constant 0 : i32
    return %c0_i32, %c0_i32_0 : i32, i32
  }
  func.func @transform_4(%arg0: i32, %arg1: i32) -> (i32, i32, i32) {
    %c0_i32 = arith.constant 0 : i32
    %c0_i32_0 = arith.constant 0 : i32
    return %arg0, %c0_i32, %arg1 : i32, i32, i32
  }
  func.func @transform_5(%arg0: i32, %arg1: i32) -> (i32, i32, i32) {
    %c0_i32 = arith.constant 0 : i32
    %c0_i32_0 = arith.constant 0 : i32
    return %arg0, %c0_i32, %arg1 : i32, i32, i32
  }
  func.func @transform_6(%arg0: i32, %arg1: i32) -> (i32, i32, i32, i32) {
    %c0_i32 = arith.constant 0 : i32
    %c0_i32_0 = arith.constant 0 : i32
    %c0_i32_1 = arith.constant 0 : i32
    return %arg0, %arg1, %c0_i32, %c0_i32_0 : i32, i32, i32, i32
  }
}

</mosaic_0001>

<llo_original>
// kernel: tpu_custom_call.1
$region0: #{tpu_custom_call.1}
  #allocation0 [shape = 'u32[]', space=smem, size = 0x4, offset = 0x4, fixed_abs, tag = 'smem constant byte address 0x4 - core index']
  #allocation1 [shape = 'u32[72,128]{1,0:T(1,128)}', space=vmem, size = 0x9000, scoped, tag = 'internal scratch']
  %s0 = inlined_call_operand.vmem [shape: f32[2,4,256], index: 0, kind: input, shape index: {}]
  %s1 = inlined_call_operand.vmem [shape: f32[8,4], index: 1, kind: input, shape index: {}]
  %s2 = inlined_call_operand.vmem [shape: f32[8,1], index: 2, kind: input, shape index: {}]
  %s3 = inlined_call_operand.vmem [shape: f32[4,8], index: 3, kind: input, shape index: {}]
  %s4 = inlined_call_operand.hbm [shape: f32[2,4,256], index: 4, kind: output, shape index: {0}]
  %s5 = inlined_call_operand.hbm [shape: s32[2,1,256], index: 5, kind: output, shape index: {1}]
  %s6 = inlined_call_operand.vmem [shape: f32[2,1,1,1], index: 6, kind: output, shape index: {2}]
  %7 = xla_tuple %s4, %s5, %s6
  %s8 = sld [smem:[#allocation0]]
  $region65: #{tpu_custom_call.1} parent=0
    _
  %s10 = ssub.s32 1, %s8
  %s11 = scalar_select 0, %s10, %s8
  $region1: #{tpu_custom_call.1} parent=0
    #allocation2 [shape = 'u8[8192]{0}', space=vmem, size = 0x2000, scoped, tag = 'output window, operand 0']
    #allocation3 [shape = 's32[2]{0}', space=sflag, size = 0x8, scoped, tag = 'scoped memory for tpu_custom_call.1']
    #allocation4 [shape = 'u8[2048]{0}', space=vmem, size = 0x800, scoped, tag = 'output window, operand 1']
    #allocation5 [shape = 's32[2]{0}', space=sflag, size = 0x8, scoped, tag = 'scoped memory for tpu_custom_call.1']
    %12 = vsyncpa [#allocation3], 0
    %s13 = scalar_lea.sflag [#allocation3], 1
    %14 = vsyncpa %s13, 0
    %15 = vsyncpa [#allocation5], 0
    %s16 = scalar_lea.sflag [#allocation5], 1
    %17 = vsyncpa %s16, 0
    loop: start=0, step=1, limit=4
    $region2: #{tpu_custom_call.1} parent=1 // loop_pre_header
      _
    $region3: #{tpu_custom_call.1} parent=1 // loop_header
      %s19 = sphi 0, %s23
      %p20 = scmp.ge.s32.totalorder %s19, 4
      %s26 = sphi 0, %s38
      %s27 = sphi 0, %s34
      %s28 = sphi 0, %s26
      %s29 = sphi 0, %s27
      %s30 = sphi 0, %s28
      %s31 = sphi 0, %s29
      %s43 = sphi 0, %s45
      %s46 = sphi 0, %s43
      %s47 = sphi 0, %s46
      %s63 = sphi 0, %s47
      %s67 = sphi 0, %s67
      %s69 = sphi 0, %s67
      %s70 = sphi 0, %s69
      %s84 = sphi 0, %s70
      %s88 = sphi 0, %s88
      %s90 = sphi 0, %s88
      %s91 = sphi 0, %s90
      %s105 = sphi 0, %s91
      %s109 = sphi 0, %s109
      %s111 = sphi 0, %s109
      %s112 = sphi 0, %s111
      %s126 = sphi 0, %s112
      %s134 = sphi 0, %s136
      %s137 = sphi 0, %s134
      %s138 = sphi 0, %s137
      %s154 = sphi 0, %s138
      %s162 = sphi 0, %s164
      %s165 = sphi 0, %s162
      %s166 = sphi 0, %s165
      %s182 = sphi 0, %s166
      %s190 = sphi 0, %s192
      %s193 = sphi 0, %s190
      %s194 = sphi 0, %s193
      %s210 = sphi 0, %s194
    $region4: #{tpu_custom_call.1} parent=1 // loop_header_branch
      %22 = sbr.rel (%p20) target = $region8
    $region5: #{tpu_custom_call.1} parent=1 // loop_body
      %s24 = ssub.s32 %s19, 1
      %s25 = ssub.s32 %s19, 2
      %s32 = sadd.s32 1, %s27
      %p33 = scmp.ge.s32.totalorder %s32, 1
      %s34 = scalar_select %p33, 0, %s32
      %s35 = sadd.s32 1, %s26
      %s36 = scalar_select %p33, %s35, %s26
      %p37 = scmp.ge.s32.totalorder %s36, 2
      %s38 = scalar_select %p37, 0, %s36
      %s39 = ssub.s32 %s26, %s38
      %s40 = ssub.s32 %s27, %s34
      %s41 = sor.u32 %s39, %s40
      %p42 = scmp.eq.s32.totalorder %s41, 0
      %s44 = sadd.s32 %s43, 1
      %s45 = scalar_select %p42, %s43, %s44
      %p48 = pneg %p42
      %p49 = scmp.eq.s32.totalorder %s19, 1
      %p50 = por %p48, %p49
      %p51 = scmp.ne.s32.totalorder %s43, %s46
      %p52 = scmp.eq.s32.totalorder %s19, 0
      %p53 = por %p51, %p52
      %p54 = scmp.ne.s32.totalorder %s43, %s46
      %p55 = scmp.eq.s32.totalorder %s24, 1
      %p56 = por %p54, %p55
      %p57 = scmp.ne.s32.totalorder %s46, %s47
      %p58 = scmp.eq.s32.totalorder %s24, 0
      %p59 = por %p57, %p58
      %p60 = scmp.ne.s32.totalorder %s46, %s47
      %p61 = scmp.eq.s32.totalorder %s25, 1
      %p62 = por %p60, %p61
      %p64 = scmp.ne.s32.totalorder %s47, %s63
      %p65 = scmp.eq.s32.totalorder %s25, 0
      %p66 = por %p64, %p65
      %s68 = sadd.s32 %s67, 1
      %p71 = scmp.eq.s32.totalorder %s19, 1
      %p72 = scmp.ne.s32.totalorder %s67, %s69
      %p73 = scmp.eq.s32.totalorder %s19, 0
      %p74 = por %p72, %p73
      %p75 = scmp.ne.s32.totalorder %s67, %s69
      %p76 = scmp.eq.s32.totalorder %s24, 1
      %p77 = por %p75, %p76
      %p78 = scmp.ne.s32.totalorder %s69, %s70
      %p79 = scmp.eq.s32.totalorder %s24, 0
      %p80 = por %p78, %p79
      %p81 = scmp.ne.s32.totalorder %s69, %s70
      %p82 = scmp.eq.s32.totalorder %s25, 1
      %p83 = por %p81, %p82
      %p85 = scmp.ne.s32.totalorder %s70, %s84
      %p86 = scmp.eq.s32.totalorder %s25, 0
      %p87 = por %p85, %p86
      %s89 = sadd.s32 %s88, 1
      %p92 = scmp.eq.s32.totalorder %s19, 1
      %p93 = scmp.ne.s32.totalorder %s88, %s90
      %p94 = scmp.eq.s32.totalorder %s19, 0
      %p95 = por %p93, %p94
      %p96 = scmp.ne.s32.totalorder %s88, %s90
      %p97 = scmp.eq.s32.totalorder %s24, 1
      %p98 = por %p96, %p97
      %p99 = scmp.ne.s32.totalorder %s90, %s91
      %p100 = scmp.eq.s32.totalorder %s24, 0
      %p101 = por %p99, %p100
      %p102 = scmp.ne.s32.totalorder %s90, %s91
      %p103 = scmp.eq.s32.totalorder %s25, 1
      %p104 = por %p102, %p103
      %p106 = scmp.ne.s32.totalorder %s91, %s105
      %p107 = scmp.eq.s32.totalorder %s25, 0
      %p108 = por %p106, %p107
      %s110 = sadd.s32 %s109, 1
      %p113 = scmp.eq.s32.totalorder %s19, 1
      %p114 = scmp.ne.s32.totalorder %s109, %s111
      %p115 = scmp.eq.s32.totalorder %s19, 0
      %p116 = por %p114, %p115
      %p117 = scmp.ne.s32.totalorder %s109, %s111
      %p118 = scmp.eq.s32.totalorder %s24, 1
      %p119 = por %p117, %p118
      %p120 = scmp.ne.s32.totalorder %s111, %s112
      %p121 = scmp.eq.s32.totalorder %s24, 0
      %p122 = por %p120, %p121
      %p123 = scmp.ne.s32.totalorder %s111, %s112
      %p124 = scmp.eq.s32.totalorder %s25, 1
      %p125 = por %p123, %p124
      %p127 = scmp.ne.s32.totalorder %s112, %s126
      %p128 = scmp.eq.s32.totalorder %s25, 0
      %p129 = por %p127, %p128
      %s130 = ssub.s32 %s26, %s38
      %s131 = ssub.s32 %s27, %s34
      %s132 = sor.u32 %s130, %s131
      %p133 = scmp.eq.s32.totalorder %s132, 0
      %s135 = sadd.s32 %s134, 1
      %s136 = scalar_select %p133, %s134, %s135
      %p139 = pneg %p133
      %p140 = scmp.eq.s32.totalorder %s19, 1
      %p141 = por %p139, %p140
      %p142 = scmp.ne.s32.totalorder %s134, %s137
      %p143 = scmp.eq.s32.totalorder %s19, 0
      %p144 = por %p142, %p143
      %p145 = scmp.ne.s32.totalorder %s134, %s137
      %p146 = scmp.eq.s32.totalorder %s24, 1
      %p147 = por %p145, %p146
      %p148 = scmp.ne.s32.totalorder %s137, %s138
      %p149 = scmp.eq.s32.totalorder %s24, 0
      %p150 = por %p148, %p149
      %p151 = scmp.ne.s32.totalorder %s137, %s138
      %p152 = scmp.eq.s32.totalorder %s25, 1
      %p153 = por %p151, %p152
      %p155 = scmp.ne.s32.totalorder %s138, %s154
      %p156 = scmp.eq.s32.totalorder %s25, 0
      %p157 = por %p155, %p156
      %s158 = ssub.s32 %s26, %s38
      %s159 = ssub.s32 %s27, %s34
      %s160 = sor.u32 %s158, %s159
      %p161 = scmp.eq.s32.totalorder %s160, 0
      %s163 = sadd.s32 %s162, 1
      %s164 = scalar_select %p161, %s162, %s163
      %p167 = pneg %p161
      %p168 = scmp.eq.s32.totalorder %s19, 1
      %p169 = por %p167, %p168
      %p170 = scmp.ne.s32.totalorder %s162, %s165
      %p171 = scmp.eq.s32.totalorder %s19, 0
      %p172 = por %p170, %p171
      %p173 = scmp.ne.s32.totalorder %s162, %s165
      %p174 = scmp.eq.s32.totalorder %s24, 1
      %p175 = por %p173, %p174
      %p176 = scmp.ne.s32.totalorder %s165, %s166
      %p177 = scmp.eq.s32.totalorder %s24, 0
      %p178 = por %p176, %p177
      %p179 = scmp.ne.s32.totalorder %s165, %s166
      %p180 = scmp.eq.s32.totalorder %s25, 1
      %p181 = por %p179, %p180
      %p183 = scmp.ne.s32.totalorder %s166, %s182
      %p184 = scmp.eq.s32.totalorder %s25, 0
      %p185 = por %p183, %p184
      %s186 = ssub.s32 %s26, %s38
      %s187 = ssub.s32 %s27, %s34
      %s188 = sor.u32 %s186, %s187
      %p189 = scmp.eq.s32.totalorder %s188, 0
      %s191 = sadd.s32 %s190, 1
      %s192 = scalar_select %p189, %s190, %s191
      %p195 = pneg %p189
      %p196 = scmp.eq.s32.totalorder %s19, 1
      %p197 = por %p195, %p196
      %p198 = scmp.ne.s32.totalorder %s190, %s193
      %p199 = scmp.eq.s32.totalorder %s19, 0
      %p200 = por %p198, %p199
      %p201 = scmp.ne.s32.totalorder %s190, %s193
      %p202 = scmp.eq.s32.totalorder %s24, 1
      %p203 = por %p201, %p202
      %p204 = scmp.ne.s32.totalorder %s193, %s194
      %p205 = scmp.eq.s32.totalorder %s24, 0
      %p206 = por %p204, %p205
      %p207 = scmp.ne.s32.totalorder %s193, %s194
      %p208 = scmp.eq.s32.totalorder %s25, 1
      %p209 = por %p207, %p208
      %p211 = scmp.ne.s32.totalorder %s194, %s210
      %p212 = scmp.eq.s32.totalorder %s25, 0
      %p213 = por %p211, %p212
      %p214 = scmp.le.s32.totalorder 1, %s19
      %p215 = scmp.lt.s32.totalorder %s19, 3
      %p216 = pnand %p214, %p215
      %p217 = pneg %p216
      // Predicated region
      $region9: #{tpu_custom_call.1} parent=5 // pred_check
        _
      $region10: #{tpu_custom_call.1} parent=5 // pred_check_branch
        %219 = sbr.rel (%p216) target = $region12
      $region11: #{tpu_custom_call.1} parent=5 // pred_region
        %s220 = ssub.s32 %s19, 1
        // Predicated region
        $region13: #{tpu_custom_call.1} parent=11 // pred_check
          %p221 = pneg %p80
        $region14: #{tpu_custom_call.1} parent=11 // pred_check_branch
          %223 = sbr.rel (%p221) target = $region16
        $region15: #{tpu_custom_call.1} parent=11 // pred_region
          _
        $region16: #{tpu_custom_call.1} parent=11 // pred_fallthru
          _
        // Predicated region
        $region17: #{tpu_custom_call.1} parent=11 // pred_check
          %p224 = pneg %p101
        $region18: #{tpu_custom_call.1} parent=11 // pred_check_branch
          %226 = sbr.rel (%p224) target = $region20
        $region19: #{tpu_custom_call.1} parent=11 // pred_region
          _
        $region20: #{tpu_custom_call.1} parent=11 // pred_fallthru
          _
        // Predicated region
        $region21: #{tpu_custom_call.1} parent=11 // pred_check
          %p227 = pneg %p122
        $region22: #{tpu_custom_call.1} parent=11 // pred_check_branch
          %229 = sbr.rel (%p227) target = $region24
        $region23: #{tpu_custom_call.1} parent=11 // pred_region
          _
        $region24: #{tpu_custom_call.1} parent=11 // pred_fallthru
          _
      $region12: #{tpu_custom_call.1} parent=5 // pred_fallthru
        _
      %p230 = scmp.lt.s32.totalorder %s19, 2
      // Predicated region
      $region25: #{tpu_custom_call.1} parent=5 // pred_check
        %p231 = pneg %p230
      $region26: #{tpu_custom_call.1} parent=5 // pred_check_branch
        %233 = sbr.rel (%p231) target = $region28
      $region27: #{tpu_custom_call.1} parent=5 // pred_region
        // Predicated region
        $region29: #{tpu_custom_call.1} parent=27 // pred_check
          %p234 = pneg %p53
        $region30: #{tpu_custom_call.1} parent=27 // pred_check_branch
          %236 = sbr.rel (%p234) target = $region32
        $region31: #{tpu_custom_call.1} parent=27 // pred_region
          %s237 = smul.u32 2, %s27
          %p238 = scmp.lt.s32.totalorder %s26, 1
          %s239 = scalar_select %p238, %s26, 1
          %p240 = scmp.lt.s32.totalorder %s237, 1
          %s241 = scalar_select %p240, %s237, 1
          %s242 = smul.addr %s239, 2
          %s243 = sadd.s32 %s241, %s242
          %s244 = smul.addr %s243, 4
          %s245 = scalar_lea.vmem %s0, %s244
          %s246 = smul.u32 2, %s27
        $region32: #{tpu_custom_call.1} parent=27 // pred_fallthru
          _
      $region28: #{tpu_custom_call.1} parent=5 // pred_fallthru
        _
      %p247 = scmp.le.s32.totalorder 1, %s19
      %p248 = scmp.lt.s32.totalorder %s19, 3
      %p249 = pnand %p247, %p248
      %p250 = pneg %p249
      // Predicated region
      $region33: #{tpu_custom_call.1} parent=5 // pred_check
        _
      $region34: #{tpu_custom_call.1} parent=5 // pred_check_branch
        %252 = sbr.rel (%p249) target = $region36
      $region35: #{tpu_custom_call.1} parent=5 // pred_region
        %s253 = ssub.s32 %s19, 1
        %s254 = smul.u32 2, %s29
        %p255 = scmp.lt.s32.totalorder %s28, 1
        %s256 = scalar_select %p255, %s28, 1
        %p257 = scmp.lt.s32.totalorder %s254, 1
        %s258 = scalar_select %p257, %s254, 1
        %s259 = smul.addr %s256, 2
        %s260 = sadd.s32 %s258, %s259
        %s261 = smul.addr %s260, 4
        %s262 = scalar_lea.vmem %s0, %s261
        %p263 = pneg %p59
        %p264 = pneg %p56
        %p265 = pneg %p80
        %p266 = pneg %p77
        %p267 = pneg %p101
        %p268 = pneg %p98
        %p269 = pneg %p122
        %p270 = pneg %p119
        %p271 = pneg %p150
        %p272 = pneg %p147
        %s273 = sand.u32 %s137, 1
        %s274 = scalar_lea.sflag [#allocation3], %s273
        %s275 = sand.u32 %s137, 1
        %s276 = smul.addr %s275, 8
        %s277 = scalar_lea.vmem [#allocation2], %s276
        %p278 = pneg %p178
        %p279 = pneg %p175
        %s280 = sand.u32 %s165, 1
        %s281 = scalar_lea.sflag [#allocation5], %s280
        %s282 = sand.u32 %s165, 1
        %s283 = smul.addr %s282, 2
        %s284 = scalar_lea.vmem [#allocation4], %s283
        %p285 = pneg %p206
        %p286 = pneg %p203
        %p287 = scmp.lt.s32.totalorder %s28, 1
        %s288 = scalar_select %p287, %s28, 1
        %p289 = scmp.lt.s32.totalorder %s29, 0
        %s290 = scalar_select %p289, %s29, 0
        %s291 = sadd.s32 %s290, %s288
        %s292 = scalar_lea.vmem %s6, %s291
        %s293 = smul.u32 2, %s29
        %p294 = scmp.lt.s32.totalorder %s28, 1
        %s295 = scalar_select %p294, %s28, 1
        %p296 = scmp.lt.s32.totalorder %s293, 1
        %s297 = scalar_select %p296, %s293, 1
        %s298 = smul.addr %s295, 2
        %s299 = sadd.s32 %s297, %s298
        %s300 = smul.addr %s299, 4
        %s301 = scalar_lea.vmem %s0, %s300
        %s302 = smul.u32 2, %s29
        %s303 = smul.u32 2, %s29
        %s304 = smul.u32 2, %s29
        %p305 = scmp.lt.s32.totalorder %s28, 1
        %s306 = scalar_select %p305, %s28, 1
        %p307 = scmp.lt.s32.totalorder %s29, 0
        %s308 = scalar_select %p307, %s29, 0
        %s309 = sadd.s32 %s308, %s306
        %s310 = scalar_lea.vmem %s6, %s309
        %v311 = vld [vmem:[%s301] sm:$0xff]
        %v312 = vld [vmem:[%s1] sm:$0xff]
        %v313 = vld [vmem:[%s2] sm:$0xff]
        %v314 = vld [vmem:[%s3] sm:$0xf]
        %316 = vset.pattern.permute.xlu0 0
        %317 = vperm.xlu0 %316, %v313
        %v318 = vpop.permute.xlu0 %317
        %321 = vst [vmem:[#allocation1] ss:$2 sm:$0xff] %v311
        %v322 = vld.sshfl [vmem:[#allocation1] sm:$0xff pattern:$0x75316420]
        %v323 = vld.sshfl [vmem:[#allocation1 + $0x8] sm:$0xff pattern:$0x75316420]
        %vm324 = vcmask 31744
        %v326 = vsel %vm324, %v312, 0
        %vm328 = vcmask 1043456
        %v329 = vsel %vm328, %v322, 0
        %v331 = vsel %vm328, %v323, 0
        %333 = vmatpush.msra.mxu0 0.0
        %334 = vmatpush.msra.mxu0 0.0
        %335 = vmatpush.msra.mxu0 0.0
        %336 = vmatpush.msra.mxu0 0.0
        %337 = vmatpush.msra.mxu0 0.0
        %338 = vmatpush.msra.mxu0 0.0
        %339 = vmatpush.msra.mxu0 0.0
        %340 = vmatpush.msra.mxu0 0.0
        %341 = vmatpush.msra.mxu0 0.0
        %342 = vmatpush.msra.mxu0 0.0
        %343 = vmatpush.msra.mxu0 0.0
        %344 = vmatpush.msra.mxu0 0.0
        %345 = vmatpush.msra.mxu0 0.0
        %346 = vmatpush.msra.mxu0 0.0
        %347 = vmatpush.msra.mxu0 0.0
        %348 = vmatpush.msra.mxu0 %v329
        %349 = vmatmul.f32.gmra.mxu0 %v326
        %v350 = vpop.f32.mrf.mxu0
        %v351 = vadd.f32 %v318, %v350
        %352 = vdwg.mxu0
        %353 = vmatpush.msra.mxu0 0.0
        %354 = vmatpush.msra.mxu0 0.0
        %355 = vmatpush.msra.mxu0 0.0
        %356 = vmatpush.msra.mxu0 0.0
        %357 = vmatpush.msra.mxu0 0.0
        %358 = vmatpush.msra.mxu0 0.0
        %359 = vmatpush.msra.mxu0 0.0
        %360 = vmatpush.msra.mxu0 0.0
        %361 = vmatpush.msra.mxu0 0.0
        %362 = vmatpush.msra.mxu0 0.0
        %363 = vmatpush.msra.mxu0 0.0
        %364 = vmatpush.msra.mxu0 0.0
        %365 = vmatpush.msra.mxu0 0.0
        %366 = vmatpush.msra.mxu0 0.0
        %367 = vmatpush.msra.mxu0 0.0
        %368 = vmatpush.msra.mxu0 %v331
        %369 = vmatmul.f32.gmra.mxu0 %v326
        %v370 = vpop.f32.mrf.mxu0
        %v371 = vadd.f32 %v318, %v370
        %372 = vdwg.mxu0
        %v373 = vlaneseq
        %v374 = vshrl.u32 %v373, 7
        %v375 = vrot.slane %v351, 4
        %v376 = vmin.f32 %v351, %v375
        %v377 = vrot.slane %v376, 2
        %v378 = vmin.f32 %v376, %v377
        %v379 = vrot.slane %v378, 1
        %v380 = vmin.f32 %v378, %v379
        %v381 = vrot.slane %v371, 4
        %v382 = vmin.f32 %v371, %v381
        %v383 = vrot.slane %v382, 2
        %v384 = vmin.f32 %v382, %v383
        %v385 = vrot.slane %v384, 1
        %v386 = vmin.f32 %v384, %v385
        %vm387 = vcmp.eq.f32.partialorder %v351, %v380
        %vm388 = vcmp.eq.f32.partialorder %v371, %v386
        %v389 = vsel %vm387, %v374, 8
        %v390 = vsel %vm388, %v374, 8
        %v391 = vrot.slane %v389, 4
        %vm392 = vcmp.lt.s32.totalorder %v389, %v391
        %v393 = vsel %vm392, %v389, %v391
        %v394 = vrot.slane %v393, 2
        %vm395 = vcmp.lt.s32.totalorder %v393, %v394
        %v396 = vsel %vm395, %v393, %v394
        %v397 = vrot.slane %v396, 1
        %vm398 = vcmp.lt.s32.totalorder %v396, %v397
        %v399 = vsel %vm398, %v396, %v397
        %v400 = vrot.slane %v390, 4
        %vm401 = vcmp.lt.s32.totalorder %v390, %v400
        %v402 = vsel %vm401, %v390, %v400
        %v403 = vrot.slane %v402, 2
        %vm404 = vcmp.lt.s32.totalorder %v402, %v403
        %v405 = vsel %vm404, %v402, %v403
        %v406 = vrot.slane %v405, 1
        %vm407 = vcmp.lt.s32.totalorder %v405, %v406
        %v408 = vsel %vm407, %v405, %v406
        %vm409 = vcmp.eq.s32.totalorder %v374, %v399
        %vm410 = vcmp.eq.s32.totalorder %v374, %v408
        %v411 = vsel %vm409, 1, 0
        %v412 = vsel %vm410, 1, 0
        %v413 = vcvt.s32.f32 %v411
        %v414 = vcvt.s32.f32 %v412
        %vm415 = vcmask 64512
        %v417 = vsel %vm415, %v314, 0
        %419 = vmatpush.msra.mxu0 0.0
        %420 = vmatpush.msra.mxu0 0.0
        %421 = vmatpush.msra.mxu0 0.0
        %422 = vmatpush.msra.mxu0 0.0
        %423 = vmatpush.msra.mxu0 0.0
        %424 = vmatpush.msra.mxu0 0.0
        %425 = vmatpush.msra.mxu0 0.0
        %426 = vmatpush.msra.mxu0 0.0
        %427 = vmatpush.msra.mxu0 0.0
        %428 = vmatpush.msra.mxu0 0.0
        %429 = vmatpush.msra.mxu0 0.0
        %430 = vmatpush.msra.mxu0 0.0
        %431 = vmatpush.msra.mxu0 0.0
        %432 = vmatpush.msra.mxu0 0.0
        %433 = vmatpush.msra.mxu0 0.0
        %434 = vmatpush.msra.mxu0 %v413
        %435 = vmatmul.f32.gmra.mxu0 %v417
        %v436 = vpop.f32.mrf.mxu0
        %v437 = vadd.f32 0.0, %v436
        %438 = vdwg.mxu0
        %439 = vmatpush.msra.mxu0 0.0
        %440 = vmatpush.msra.mxu0 0.0
        %441 = vmatpush.msra.mxu0 0.0
        %442 = vmatpush.msra.mxu0 0.0
        %443 = vmatpush.msra.mxu0 0.0
        %444 = vmatpush.msra.mxu0 0.0
        %445 = vmatpush.msra.mxu0 0.0
        %446 = vmatpush.msra.mxu0 0.0
        %447 = vmatpush.msra.mxu0 0.0
        %448 = vmatpush.msra.mxu0 0.0
        %449 = vmatpush.msra.mxu0 0.0
        %450 = vmatpush.msra.mxu0 0.0
        %451 = vmatpush.msra.mxu0 0.0
        %452 = vmatpush.msra.mxu0 0.0
        %453 = vmatpush.msra.mxu0 0.0
        %454 = vmatpush.msra.mxu0 %v414
        %455 = vmatmul.f32.gmra.mxu0 %v417
        %v456 = vpop.f32.mrf.mxu0
        %v457 = vadd.f32 0.0, %v456
        %458 = vdwg.mxu0
        %v461 = vrot.slane %v457, 4
        %v462 = vsel %vm328, %v437, %v461
        %464 = vst [vmem:[%s277] sm:$0xff] %v462
        %v465 = vrot.slane %v408, 7
        %vm466 = vcmask 1040384
        %v467 = vsel %vm466, %v399, %v465
        %v468 = vlaneseq
        %vm469 = vcmp.ge.s32.totalorder %v468, 0
        %vm470 = vcmp.lt.s32.totalorder %v468, 256
        %vm471 = vmand %vm469, %vm470
        %472 = vst.msk [vmem:[%s284] sm:$0x3] %vm471, %v467
        %473 = vst [vmem:[#allocation1] ss:$2 sm:$0xff] %v311
        %v474 = vld.sshfl [vmem:[#allocation1] sm:$0xff pattern:$0x75316420]
        %v475 = vld.sshfl [vmem:[#allocation1 + $0x8] sm:$0xff pattern:$0x75316420]
        %v478 = vsub.f32 %v437, %v474
        %v479 = vsub.f32 %v457, %v475
        %v480 = vmul.f32 %v478, %v478
        %v481 = vmul.f32 %v479, %v479
        %v482 = vsel %vm328, %v480, 0.0
        %v483 = vsel %vm328, %v481, 0.0
        %v484 = vadd.f32 %v482, %v483
        %485 = vadd.xlane.f32.xlu0 %v484
        %v486 = vpop.xlane.xlu0 %485
        %v487 = vrot.slane %v486, 4
        %v488 = vadd.f32 %v486, %v487
        %v489 = vrot.slane %v488, 2
        %v490 = vadd.f32 %v488, %v489
        %v491 = vrot.slane %v490, 1
        %v492 = vadd.f32 %v490, %v491
        %s493 = vtos %v492
        %v494 = vstv %s493
        %vm495 = vcmask 0
        %496 = vst.msk [vmem:[%s310] sm:$0x1] %vm495, %v494
        %s497 = sand.u32 %s137, 1
        %s498 = scalar_lea.sflag [#allocation3], %s497
        %s499 = sand.u32 %s137, 1
        %s500 = smul.addr %s499, 8
        %s501 = scalar_lea.vmem [#allocation2], %s500
        %s502 = sand.u32 %s165, 1
        %s503 = scalar_lea.sflag [#allocation5], %s502
        %s504 = sand.u32 %s165, 1
        %s505 = smul.addr %s504, 2
        %s506 = scalar_lea.vmem [#allocation4], %s505
        %p507 = scmp.lt.s32.totalorder %s28, 1
        %s508 = scalar_select %p507, %s28, 1
        %p509 = scmp.lt.s32.totalorder %s29, 0
        %s510 = scalar_select %p509, %s29, 0
        %s511 = sadd.s32 %s510, %s508
        %s512 = scalar_lea.vmem %s6, %s511
        // Predicated region
        $region37: #{tpu_custom_call.1} parent=35 // pred_check
          %p513 = pneg %p147
        $region38: #{tpu_custom_call.1} parent=35 // pred_check_branch
          %515 = sbr.rel (%p513) target = $region40
        $region39: #{tpu_custom_call.1} parent=35 // pred_region
          %s516 = smul.u32 2, %s29
          %518 = vsyncadd %s498, 0
          %s519 = smul.addr %s28, 2
          %s520 = sadd.s32 %s516, %s519
          %s521 = smul.addr %s520, 4
          %s522 = scalar_lea.hbm %s4, %s521
          %s524 = sshll.u32 %s501, 4
          %s525 = int_to_ptr.vmem [resolvable:$true] %s524
          %s526 = sshll.u32 %s522, 4
          %s527 = int_to_ptr.hbm [resolvable:$true] %s526
          %529 = dma.vmem_to_hbm [thread:$0]  %s525, 128, %s527, %s498
        $region40: #{tpu_custom_call.1} parent=35 // pred_fallthru
          _
        // Predicated region
        $region41: #{tpu_custom_call.1} parent=35 // pred_check
          %p530 = pneg %p175
        $region42: #{tpu_custom_call.1} parent=35 // pred_check_branch
          %532 = sbr.rel (%p530) target = $region44
        $region43: #{tpu_custom_call.1} parent=35 // pred_region
          %s533 = smul.u32 2, %s29
          %535 = vsyncadd %s503, 0
          %s536 = smul.addr %s28, 2
          %s537 = sadd.s32 %s533, %s536
          %s538 = scalar_lea.hbm %s5, %s537
          %s540 = sshll.u32 %s506, 4
          %s541 = int_to_ptr.vmem [resolvable:$true] %s540
          %s542 = sshll.u32 %s538, 4
          %s543 = int_to_ptr.hbm [resolvable:$true] %s542
          %545 = dma.vmem_to_hbm [thread:$0]  %s541, 32, %s543, %s503
        $region44: #{tpu_custom_call.1} parent=35 // pred_fallthru
          _
        // Predicated region
        $region45: #{tpu_custom_call.1} parent=35 // pred_check
          %p546 = pneg %p203
        $region46: #{tpu_custom_call.1} parent=35 // pred_check_branch
          %548 = sbr.rel (%p546) target = $region48
        $region47: #{tpu_custom_call.1} parent=35 // pred_region
          _
        $region48: #{tpu_custom_call.1} parent=35 // pred_fallthru
          _
      $region36: #{tpu_custom_call.1} parent=5 // pred_fallthru
        _
      %p549 = scmp.le.s32.totalorder 2, %s19
      // Predicated region
      $region49: #{tpu_custom_call.1} parent=5 // pred_check
        %p550 = pneg %p549
      $region50: #{tpu_custom_call.1} parent=5 // pred_check_branch
        %552 = sbr.rel (%p550) target = $region52
      $region51: #{tpu_custom_call.1} parent=5 // pred_region
        %s553 = ssub.s32 %s19, 2
        // Predicated region
        $region53: #{tpu_custom_call.1} parent=51 // pred_check
          %p554 = pneg %p153
        $region54: #{tpu_custom_call.1} parent=51 // pred_check_branch
          %556 = sbr.rel (%p554) target = $region56
        $region55: #{tpu_custom_call.1} parent=51 // pred_region
          %s557 = sand.u32 %s138, 1
          %s558 = scalar_lea.sflag [#allocation3], %s557
          %s559 = sand.u32 %s138, 1
          %s560 = smul.addr %s559, 8
          %s561 = scalar_lea.vmem [#allocation2], %s560
          %563 = dma.done %s558, 128
        $region56: #{tpu_custom_call.1} parent=51 // pred_fallthru
          _
        // Predicated region
        $region57: #{tpu_custom_call.1} parent=51 // pred_check
          %p564 = pneg %p181
        $region58: #{tpu_custom_call.1} parent=51 // pred_check_branch
          %566 = sbr.rel (%p564) target = $region60
        $region59: #{tpu_custom_call.1} parent=51 // pred_region
          %s567 = sand.u32 %s166, 1
          %s568 = scalar_lea.sflag [#allocation5], %s567
          %s569 = sand.u32 %s166, 1
          %s570 = smul.addr %s569, 2
          %s571 = scalar_lea.vmem [#allocation4], %s570
          %573 = dma.done %s568, 32
        $region60: #{tpu_custom_call.1} parent=51 // pred_fallthru
          _
        // Predicated region
        $region61: #{tpu_custom_call.1} parent=51 // pred_check
          %p574 = pneg %p209
        $region62: #{tpu_custom_call.1} parent=51 // pred_check_branch
          %576 = sbr.rel (%p574) target = $region64
        $region63: #{tpu_custom_call.1} parent=51 // pred_region
          %p577 = scmp.lt.s32.totalorder %s30, 1
          %s578 = scalar_select %p577, %s30, 1
          %p579 = scmp.lt.s32.totalorder %s31, 0
          %s580 = scalar_select %p579, %s31, 0
          %s581 = sadd.s32 %s580, %s578
          %s582 = scalar_lea.vmem %s6, %s581
        $region64: #{tpu_custom_call.1} parent=51 // pred_fallthru
          _
      $region52: #{tpu_custom_call.1} parent=5 // pred_fallthru
        _
    $region6: #{tpu_custom_call.1} parent=1 // loop_footer
      %s23 = sadd.s32 1, %s19
    $region7: #{tpu_custom_call.1} parent=1 // loop_footer_branch
      %18 = sbr.rel target = $region3
    $region8: #{tpu_custom_call.1} parent=1 // loop_exit
      _
    %583 = vsyncpa [#allocation3], 1
    %s584 = scalar_lea.sflag [#allocation3], 1
    %585 = vsyncpa %s584, 1
    %586 = vsyncpa [#allocation5], 1
    %s587 = scalar_lea.sflag [#allocation5], 1
    %588 = vsyncpa %s587, 1

</llo_original>
